<compile_context>
chip_gen: v5e
topology: v5e:2x2
jax: 0.10.0
libtpu: 0.0.40
codegen_flags: <defaults>
</compile_context>

<pallas_src>
import jax
import jax.numpy as jnp
from jax.experimental import pallas as pl
from jax.experimental.pallas import tpu as pltpu


def abmil_kernel(len_ref, x_ref, wg_ref, wpt_ref, out_ref, m_sc, l_sc, z_sc):
    # len_ref: (1, BT, 1)   int32 per-bag valid lengths
    # x_ref:   (BT, TN, D)  xs tile (native dtype)
    # wg_ref:  (BT, 2, D)   fused gate weights, resident (constant index_map)
    # wpt_ref: (D, Lp)      projection, pre-transposed + lane-padded, resident
    # out_ref: (BT, 1, Lp)  f32 output block (resident across the N axis)
    # m_sc/l_sc: (BT, 1) f32 running max / running denom
    # z_sc:      (BT, D) f32 running attention-weighted sum of xs
    k = pl.program_id(1)
    bt, tn, _ = x_ref.shape

    @pl.when(k == 0)
    def _init():
        m_sc[...] = jnp.full(m_sc.shape, -jnp.inf, m_sc.dtype)
        l_sc[...] = jnp.zeros(l_sc.shape, l_sc.dtype)
        z_sc[...] = jnp.zeros(z_sc.shape, z_sc.dtype)

    x = x_ref[...]                                                 # (BT, TN, D)

    # Gate scores: one batched matmul contracting D (same orientation as the
    # flash-attention 'bqd,bkd->bqk' pattern), f32 accumulation on the MXU.
    s = jnp.einsum('bgd,bnd->bgn', wg_ref[...], x,
                   preferred_element_type=jnp.float32)             # (BT, 2, TN)
    a = jnp.tanh(s[:, 0, :]) * jax.nn.sigmoid(s[:, 1, :])          # (BT, TN)

    # Rebuild the validity mask from per-bag lengths (no mask HBM stream).
    lens = len_ref[0]                                              # (BT, 1) i32
    col = jax.lax.broadcasted_iota(jnp.int32, (bt, tn), 1) + k * tn
    a = jnp.where(col < lens, a, jnp.float32(-10000.0))

    # Online softmax update (exact for n_steps == 1).
    m_prev = m_sc[...]
    m_new = jnp.maximum(m_prev, jnp.max(a, axis=-1, keepdims=True))
    alpha = jnp.exp(m_prev - m_new)                                # 0 on first chunk
    e = jnp.exp(a - m_new)                                         # (BT, TN)
    l_sc[...] = alpha * l_sc[...] + jnp.sum(e, axis=-1, keepdims=True)

    # Attention-weighted pooling on the MXU: (BT,1,TN) x (BT,TN,D) -> (BT,1,D).
    pz = jnp.einsum('bqn,bnd->bqd', e[:, None, :].astype(x.dtype), x,
                    preferred_element_type=jnp.float32)
    z_sc[...] = alpha * z_sc[...] + pz[:, 0, :]
    m_sc[...] = m_new

    @pl.when(k == pl.num_programs(1) - 1)
    def _finalize():
        inv = pl.reciprocal(l_sc[...], approx=True)                # EUP slot
        z = z_sc[...] * inv                                        # (BT, D) f32
        res = jnp.dot(z, wpt_ref[...],
                      preferred_element_type=jnp.float32)          # (BT, Lp)
        out_ref[...] = res[:, None, :].astype(out_ref.dtype)


def _ceil_to(x, m):
    return ((x + m - 1) // m) * m


def _vmem_plan(B, N, D, L, itemsize):
    """Generation-aware tile plan: (bags_per_step, patches_per_step, vmem_limit)."""
    try:
        cap = int(pltpu.get_tpu_info().vmem_capacity_bytes)   # 128 MiB v5e/v6e, 64 MiB v7x
    except Exception:
        cap = 64 << 20                                        # conservative fallback
    vmem_limit = int(min((cap * 3) // 4, 100 << 20))          # ~96 MiB v5e/v6e, ~48 MiB v7x
    l_pad = _ceil_to(max(L, 1), 128)

    def bytes_needed(bt, tn):
        xs_stream = 2 * bt * tn * D * itemsize                # double-buffered xs tile
        gates = 2 * bt * 2 * D * itemsize                     # resident gate weights
        proj = 2 * D * l_pad * 4                              # resident projection
        outb = 2 * bt * 8 * l_pad * 4                         # out block (sublane-padded)
        lens = 2 * 8 * 128 * 4                                # lengths block (padded)
        scratch = bt * D * 4 + 2 * bt * 128 * 4               # z / m / l accumulators
        temps = 6 * bt * tn * 4 + bt * D * 4                  # f32 score/exp temps
        return xs_stream + gates + proj + outb + lens + scratch + temps + (2 << 20)

    min_steps = min(4, B)                 # >= 2 pipelined steps per v7x TensorCore
    bt_cap = max(1, B // max(1, min_steps))

    # Preferred: whole bag(s) per block (single-chunk softmax). Prefer divisors of B.
    fitting = [bt for bt in range(min(B, bt_cap), 0, -1) if bytes_needed(bt, N) <= vmem_limit]
    if fitting:
        bt = next((c for c in fitting if B % c == 0), fitting[0])
        return dict(bt=bt, tn=N, l_pad=l_pad, vmem_limit=vmem_limit)

    # Fallback: N-tiled online softmax for bags too large for one VMEM block.
    tn = _ceil_to(N, 8)
    while tn > 8 and bytes_needed(1, tn) > vmem_limit:
        tn = max(8, _ceil_to(tn // 2, 8))
    return dict(bt=1, tn=tn, l_pad=l_pad, vmem_limit=vmem_limit)


def abmil_forward(xs, valid_inds, w_gate1, w_gate2, w_proj, *,
                  bags_per_step=None, patches_per_step=None):
    """xs: [B, N, D]; valid_inds: [B, N] bool; w_gate*: [1, D]; w_proj: [L, D].
    Returns [B, L] float32."""
    B, N, D = xs.shape
    L = w_proj.shape[0]
    itemsize = jnp.dtype(xs.dtype).itemsize

    plan = _vmem_plan(B, N, D, L, itemsize)
    bt = int(bags_per_step) if bags_per_step is not None else plan["bt"]
    tn = int(patches_per_step) if patches_per_step is not None else plan["tn"]
    l_pad, vmem_limit = plan["l_pad"], plan["vmem_limit"]

    bt = max(1, min(bt, B))
    tn = N if tn >= N else _ceil_to(tn, 8)       # block sublane-dim constraint

    b_pad = _ceil_to(B, bt)
    n_pad = _ceil_to(N, tn)

    # TODO(synk): valid_inds is reduced to per-bag lengths (prefix padding, as
    # produced by PatchBatch); arbitrary "hole" masks would need the full mask stream.
    lengths = jnp.sum(valid_inds.astype(jnp.int32), axis=-1)
    lengths_p = jnp.zeros((b_pad,), jnp.int32).at[:B].set(lengths)
    lengths_p = lengths_p.reshape(b_pad // bt, bt, 1)

    xs_p = xs
    if (b_pad, n_pad) != (B, N):
        xs_p = jnp.zeros((b_pad, n_pad, D), xs.dtype).at[:B, :N, :].set(xs)

    # Fused gate weights, pre-broadcast to the bag tile once (resident in VMEM).
    w_gates = jnp.concatenate([w_gate1, w_gate2], axis=0).astype(xs.dtype)   # (2, D)
    w_gates_b = jnp.tile(w_gates[None], (bt, 1, 1))                          # (BT, 2, D)
    # Pre-transposed, lane-padded projection (resident, f32 for accumulation parity).
    w_proj_t = (jnp.zeros((D, l_pad), jnp.float32)
                .at[:, :L].set(w_proj.T.astype(jnp.float32)))                # (D, Lp)

    grid = (b_pad // bt, n_pad // tn)

    cost = pl.CostEstimate(
        flops=int(6 * b_pad * n_pad * D + 2 * b_pad * D * l_pad),
        transcendentals=int(3 * b_pad * n_pad),
        bytes_accessed=int(xs_p.size * itemsize + w_gates_b.size * itemsize
                           + w_proj_t.size * 4 + b_pad * l_pad * 4
                           + lengths_p.size * 4),
    )

    out = pl.pallas_call(
        abmil_kernel,
        out_shape=jax.ShapeDtypeStruct((b_pad, 1, l_pad), jnp.float32),
        grid_spec=pltpu.PrefetchScalarGridSpec(
            num_scalar_prefetch=0,
            grid=grid,
            in_specs=[
                pl.BlockSpec((1, bt, 1), lambda b, k: (b, 0, 0)),    # per-bag lengths
                pl.BlockSpec((bt, tn, D), lambda b, k: (b, k, 0)),   # xs tile
                pl.BlockSpec((bt, 2, D), lambda b, k: (0, 0, 0)),    # gate weights (resident)
                pl.BlockSpec((D, l_pad), lambda b, k: (0, 0)),       # projection (resident)
            ],
            out_specs=pl.BlockSpec((bt, 1, l_pad), lambda b, k: (b, 0, 0)),
            scratch_shapes=[
                pltpu.VMEM((bt, 1), jnp.float32),   # running max m
                pltpu.VMEM((bt, 1), jnp.float32),   # running denom l
                pltpu.VMEM((bt, D), jnp.float32),   # running pooled z
            ],
        ),
        compiler_params=pltpu.CompilerParams(
            dimension_semantics=("parallel", "arbitrary"),
            vmem_limit_bytes=vmem_limit,
        ),
        cost_estimate=cost,
    )(lengths_p, xs_p, w_gates_b, w_proj_t)

    return out[:B, 0, :L]


def abmil_reference(xs, valid_inds, w_gate1, w_gate2, w_proj):
    """Pure-JAX reference matching the PyTorch forward."""
    a1 = jnp.tanh(xs @ w_gate1.T)            # [B, N, 1]
    a2 = jax.nn.sigmoid(xs @ w_gate2.T)      # [B, N, 1]
    a = a1 * a2
    a = jnp.where(valid_inds[..., None], a, -10000.0)
    a = jax.nn.softmax(a[..., 0], axis=-1)   # [B, N]
    z = jnp.sum(a[..., None] * xs, axis=1)   # [B, D]
    return z @ w_proj.T                      # [B, L]


if __name__ == "__main__":
    # Small shapes: 8 bags, 16 patches per bag, patch_embed_dim=128, 3 logits.
    B, N, D, L = 8, 16, 128, 3

    key = jax.random.PRNGKey(0)
    k_x, k_w1, k_w2, k_wp = jax.random.split(key, 4)

    xs = jax.random.normal(k_x, (B, N, D), dtype=jnp.float32)

    # Deterministic per-bag valid lengths (some bags padded).
    lengths = jnp.array([16, 12, 9, 16, 1, 7, 16, 5], dtype=jnp.int32)
    valid_inds = jnp.arange(N)[None, :] < lengths[:, None]          # [B, N] bool

    # Deterministic "Linear(bias=False)" weights.
    w_gate1 = jax.random.normal(k_w1, (1, D), dtype=jnp.float32) * 0.1
    w_gate2 = jax.random.normal(k_w2, (1, D), dtype=jnp.float32) * 0.1
    w_proj = jax.random.normal(k_wp, (L, D), dtype=jnp.float32) * 0.1

    ref = abmil_reference(xs, valid_inds, w_gate1, w_gate2, w_proj)

    # Auto-planned path: whole bags per block, >=4 grid steps on the bag axis.
    out = jax.block_until_ready(
        abmil_forward(xs, valid_inds, w_gate1, w_gate2, w_proj))
    assert out.shape == (B, L), out.shape
    # Tolerance slightly loosened vs exact math: softmax denominator uses the
    # EUP approximate reciprocal.
    assert jnp.allclose(out, ref, atol=3e-3, rtol=3e-3), (out, ref)

    # Forced N-tiled online-softmax path (the large-bag / v7x fallback).
    out_t = jax.block_until_ready(
        abmil_forward(xs, valid_inds, w_gate1, w_gate2, w_proj,
                      bags_per_step=1, patches_per_step=8))
    assert out_t.shape == (B, L), out_t.shape
    assert jnp.allclose(out_t, ref, atol=3e-3, rtol=3e-3), (out_t, ref)

    print("KERNEL_OK")
</pallas_src>

<mosaic_0001>
module attributes {stable_mosaic.version = 11 : i64} {
  func.func @abmil_kernel(%arg0: i32, %arg1: i32, %arg2: memref<1x2x1xi32, #tpu.memory_space<vmem>>, %arg3: memref<2x16x128xf32, #tpu.memory_space<vmem>>, %arg4: memref<2x2x128xf32, #tpu.memory_space<vmem>>, %arg5: memref<128x128xf32, #tpu.memory_space<vmem>>, %arg6: memref<2x1x128xf32, #tpu.memory_space<vmem>>, %arg7: memref<2x1xf32, #tpu.memory_space<vmem>>, %arg8: memref<2x1xf32, #tpu.memory_space<vmem>>, %arg9: memref<2x128xf32, #tpu.memory_space<vmem>>) attributes {dimension_semantics = [#tpu.dimension_semantics<parallel>, #tpu.dimension_semantics<arbitrary>], iteration_bounds = array<i64: 4, 1>, scalar_prefetch = 0 : i64, scratch_operands = 3 : i64, tpu.core_type = #tpu.core_type<tc>, window_params = [{transform_indices = @transform_0, window_bounds = array<i64: 1, 2, 1>}, {transform_indices = @transform_1, window_bounds = array<i64: 2, 16, 128>}, {pipeline_mode = #tpu.pipeline_mode<synchronous>, transform_indices = @transform_2, window_bounds = array<i64: 2, 2, 128>}, {pipeline_mode = #tpu.pipeline_mode<synchronous>, transform_indices = @transform_3, window_bounds = array<i64: 128, 128>}, {transform_indices = @transform_4, window_bounds = array<i64: 2, 1, 128>}]} {
    %c0_i32 = arith.constant 0 : i32
    %0 = arith.cmpi eq, %arg1, %c0_i32 : i32
    %1 = arith.extui %0 : i1 to i32
    %c0_i32_0 = arith.constant 0 : i32
    %2 = arith.cmpi ne, %1, %c0_i32_0 : i32
    scf.if %2 {
      %cst_28 = arith.constant 0xFF800000 : f32
      %54 = vector.broadcast %cst_28 : f32 to vector<2x1xf32>
      %c0_29 = arith.constant 0 : index
      %c0_30 = arith.constant 0 : index
      %55 = vector.load %arg7[%c0_29, %c0_30] : memref<2x1xf32, #tpu.memory_space<vmem>>, vector<2x1xf32>
      tpu.vector_store %arg7[%c0_29, %c0_30], %54 {strides = array<i32>} : memref<2x1xf32, #tpu.memory_space<vmem>>, vector<2x1xf32>,
      %cst_31 = arith.constant 0.000000e+00 : f32
      %56 = vector.broadcast %cst_31 : f32 to vector<2x1xf32>
      %c0_32 = arith.constant 0 : index
      %c0_33 = arith.constant 0 : index
      %57 = vector.load %arg8[%c0_32, %c0_33] : memref<2x1xf32, #tpu.memory_space<vmem>>, vector<2x1xf32>
      tpu.vector_store %arg8[%c0_32, %c0_33], %56 {strides = array<i32>} : memref<2x1xf32, #tpu.memory_space<vmem>>, vector<2x1xf32>,
      %cst_34 = arith.constant 0.000000e+00 : f32
      %58 = vector.broadcast %cst_34 : f32 to vector<2x128xf32>
      %c0_35 = arith.constant 0 : index
      %c0_36 = arith.constant 0 : index
      %59 = vector.load %arg9[%c0_35, %c0_36] : memref<2x128xf32, #tpu.memory_space<vmem>>, vector<2x128xf32>
      tpu.vector_store %arg9[%c0_35, %c0_36], %58 {strides = array<i32>} : memref<2x128xf32, #tpu.memory_space<vmem>>, vector<2x128xf32>,
    } else {
    }
    %c0 = arith.constant 0 : index
    %c0_1 = arith.constant 0 : index
    %c0_2 = arith.constant 0 : index
    %3 = vector.load %arg3[%c0, %c0_1, %c0_2] : memref<2x16x128xf32, #tpu.memory_space<vmem>>, vector<2x16x128xf32>
    %c0_3 = arith.constant 0 : index
    %c0_4 = arith.constant 0 : index
    %c0_5 = arith.constant 0 : index
    %4 = vector.load %arg4[%c0_3, %c0_4, %c0_5] : memref<2x2x128xf32, #tpu.memory_space<vmem>>, vector<2x2x128xf32>
    "tpu.trace_start"() <{level = 10 : i32, message = "bgd,bnd->bgn"}> : () -> ()
    %cst = arith.constant dense<0.000000e+00> : vector<2x2x16xf32>
    %5 = tpu.matmul %4, %3, %cst {dimension_numbers = #tpu.dot_dimension_numbers<[2], [2], [1], [1], [0, 0, 0, 1, 1, 1], [0], [0]>} : vector<2x2x128xf32>, vector<2x16x128xf32>, vector<2x2x16xf32> -> vector<2x2x16xf32>
    "tpu.trace_stop"() : () -> ()
    %6 = vector.extract_strided_slice %5 {offsets = [0, 0, 0], sizes = [2, 1, 16], strides = [1, 1, 1]} : vector<2x2x16xf32> to vector<2x1x16xf32>
    %7 = vector.shape_cast %6 : vector<2x1x16xf32> to vector<2x16xf32>
    %8 = math.tanh %7 : vector<2x16xf32>
    %9 = vector.extract_strided_slice %5 {offsets = [0, 1, 0], sizes = [2, 1, 16], strides = [1, 1, 1]} : vector<2x2x16xf32> to vector<2x1x16xf32>
    %10 = vector.shape_cast %9 : vector<2x1x16xf32> to vector<2x16xf32>
    %11 = arith.negf %10 : vector<2x16xf32>
    %12 = math.exp %11 : vector<2x16xf32>
    %cst_6 = arith.constant 1.000000e+00 : f32
    %13 = vector.broadcast %cst_6 : f32 to vector<2x16xf32>
    %14 = arith.addf %13, %12 : vector<2x16xf32>
    %15 = arith.divf %13, %14 : vector<2x16xf32>
    %16 = arith.mulf %8, %15 : vector<2x16xf32>
    %c0_7 = arith.constant 0 : index
    %c0_8 = arith.constant 0 : index
    %c0_9 = arith.constant 0 : index
    %17 = vector.load %arg2[%c0_7, %c0_8, %c0_9] : memref<1x2x1xi32, #tpu.memory_space<vmem>>, vector<1x2x1xi32>
    %18 = vector.shape_cast %17 : vector<1x2x1xi32> to vector<2x1xi32>
    %19 = tpu.iota {dimensions = array<i32: 1>} : vector<2x16xi32>
    %c16_i32 = arith.constant 16 : i32
    %20 = arith.muli %arg1, %c16_i32 : i32
    %21 = vector.broadcast %20 : i32 to vector<2x16xi32>
    %22 = arith.addi %19, %21 : vector<2x16xi32>
    %23 = vector.broadcast %18 : vector<2x1xi32> to vector<2x16xi32>
    %24 = arith.cmpi slt, %22, %23 : vector<2x16xi32>
    %cst_10 = arith.constant -1.000000e+04 : f32
    %25 = vector.broadcast %cst_10 : f32 to vector<2x16xf32>
    %26 = arith.select %24, %16, %25 : vector<2x16xi1>, vector<2x16xf32>
    %c0_11 = arith.constant 0 : index
    %c0_12 = arith.constant 0 : index
    %27 = vector.load %arg7[%c0_11, %c0_12] : memref<2x1xf32, #tpu.memory_space<vmem>>, vector<2x1xf32>
    %cst_13 = arith.constant dense<0xFF800000> : vector<2xf32>
    %28 = vector.multi_reduction <maximumf>, %26, %cst_13 [1] : vector<2x16xf32> to vector<2xf32>
    %29 = vector.shape_cast %28 : vector<2xf32> to vector<2x1xf32>
    %30 = arith.maximumf %27, %29 : vector<2x1xf32>
    %31 = arith.subf %27, %30 : vector<2x1xf32>
    %32 = math.exp %31 : vector<2x1xf32>
    %33 = vector.broadcast %30 : vector<2x1xf32> to vector<2x16xf32>
    %34 = arith.subf %26, %33 : vector<2x16xf32>
    %35 = math.exp %34 : vector<2x16xf32>
    %c0_14 = arith.constant 0 : index
    %c0_15 = arith.constant 0 : index
    %36 = vector.load %arg8[%c0_14, %c0_15] : memref<2x1xf32, #tpu.memory_space<vmem>>, vector<2x1xf32>
    %37 = arith.mulf %32, %36 : vector<2x1xf32>
    %cst_16 = arith.constant dense<0.000000e+00> : vector<2xf32>
    %38 = vector.multi_reduction <add>, %35, %cst_16 [1] : vector<2x16xf32> to vector<2xf32>
    %39 = vector.shape_cast %38 : vector<2xf32> to vector<2x1xf32>
    %40 = arith.addf %37, %39 : vector<2x1xf32>
    %c0_17 = arith.constant 0 : index
    %c0_18 = arith.constant 0 : index
    %41 = vector.load %arg8[%c0_17, %c0_18] : memref<2x1xf32, #tpu.memory_space<vmem>>, vector<2x1xf32>
    tpu.vector_store %arg8[%c0_17, %c0_18], %40 {strides = array<i32>} : memref<2x1xf32, #tpu.memory_space<vmem>>, vector<2x1xf32>,
    %42 = vector.shape_cast %35 : vector<2x16xf32> to vector<2x1x16xf32>
    "tpu.trace_start"() <{level = 10 : i32, message = "bqn,bnd->bqd"}> : () -> ()
    %cst_19 = arith.constant dense<0.000000e+00> : vector<2x1x128xf32>
    %43 = tpu.matmul %42, %3, %cst_19 {dimension_numbers = #tpu.dot_dimension_numbers<[2], [1], [1], [2], [0, 0, 0, 1, 1, 2], [0], [0]>} : vector<2x1x16xf32>, vector<2x16x128xf32>, vector<2x1x128xf32> -> vector<2x1x128xf32>
    "tpu.trace_stop"() : () -> ()
    %c0_20 = arith.constant 0 : index
    %c0_21 = arith.constant 0 : index
    %44 = vector.load %arg9[%c0_20, %c0_21] : memref<2x128xf32, #tpu.memory_space<vmem>>, vector<2x128xf32>
    %45 = vector.broadcast %32 : vector<2x1xf32> to vector<2x128xf32>
    %46 = arith.mulf %45, %44 : vector<2x128xf32>
    %47 = vector.shape_cast %43 : vector<2x1x128xf32> to vector<2x128xf32>
    %48 = arith.addf %46, %47 : vector<2x128xf32>
    %c0_22 = arith.constant 0 : index
    %c0_23 = arith.constant 0 : index
    %49 = vector.load %arg9[%c0_22, %c0_23] : memref<2x128xf32, #tpu.memory_space<vmem>>, vector<2x128xf32>
    tpu.vector_store %arg9[%c0_22, %c0_23], %48 {strides = array<i32>} : memref<2x128xf32, #tpu.memory_space<vmem>>, vector<2x128xf32>,
    %c0_24 = arith.constant 0 : index
    %c0_25 = arith.constant 0 : index
    %50 = vector.load %arg7[%c0_24, %c0_25] : memref<2x1xf32, #tpu.memory_space<vmem>>, vector<2x1xf32>
    tpu.vector_store %arg7[%c0_24, %c0_25], %30 {strides = array<i32>} : memref<2x1xf32, #tpu.memory_space<vmem>>, vector<2x1xf32>,
    %c0_i32_26 = arith.constant 0 : i32
    %51 = arith.cmpi eq, %arg1, %c0_i32_26 : i32
    %52 = arith.extui %51 : i1 to i32
    %c0_i32_27 = arith.constant 0 : i32
    %53 = arith.cmpi ne, %52, %c0_i32_27 : i32
    scf.if %53 {
      %c0_28 = arith.constant 0 : index
      %c0_29 = arith.constant 0 : index
      %54 = vector.load %arg8[%c0_28, %c0_29] : memref<2x1xf32, #tpu.memory_space<vmem>>, vector<2x1xf32>
      %55 = tpu.reciprocal %54 {approx = true} : vector<2x1xf32> -> vector<2x1xf32>
      %c0_30 = arith.constant 0 : index
      %c0_31 = arith.constant 0 : index
      %56 = vector.load %arg9[%c0_30, %c0_31] : memref<2x128xf32, #tpu.memory_space<vmem>>, vector<2x128xf32>
      %57 = vector.broadcast %55 : vector<2x1xf32> to vector<2x128xf32>
      %58 = arith.mulf %56, %57 : vector<2x128xf32>
      %c0_32 = arith.constant 0 : index
      %c0_33 = arith.constant 0 : index
      %59 = vector.load %arg5[%c0_32, %c0_33] : memref<128x128xf32, #tpu.memory_space<vmem>>, vector<128x128xf32>
      %cst_34 = arith.constant dense<0.000000e+00> : vector<2x128xf32>
      %60 = tpu.matmul %58, %59, %cst_34 {dimension_numbers = #tpu.dot_dimension_numbers<[1], [0], [0], [1], [0, 0, 1, 1], [], []>} : vector<2x128xf32>, vector<128x128xf32>, vector<2x128xf32> -> vector<2x128xf32>
      %61 = vector.shape_cast %60 : vector<2x128xf32> to vector<2x1x128xf32>
      %c0_35 = arith.constant 0 : index
      %c0_36 = arith.constant 0 : index
      %c0_37 = arith.constant 0 : index
      %62 = vector.load %arg6[%c0_35, %c0_36, %c0_37] : memref<2x1x128xf32, #tpu.memory_space<vmem>>, vector<2x1x128xf32>
      tpu.vector_store %arg6[%c0_35, %c0_36, %c0_37], %61 {strides = array<i32>} : memref<2x1x128xf32, #tpu.memory_space<vmem>>, vector<2x1x128xf32>,
    } else {
    }
    return
  }
  func.func @transform_0(%arg0: i32, %arg1: i32) -> (i32, i32, i32) {
    %c0_i32 = arith.constant 0 : i32
    %c0_i32_0 = arith.constant 0 : i32
    %c0_i32_1 = arith.constant 0 : i32
    return %arg0, %c0_i32, %c0_i32_0 : i32, i32, i32
  }
  func.func @transform_1(%arg0: i32, %arg1: i32) -> (i32, i32, i32) {
    %c0_i32 = arith.constant 0 : i32
    %c0_i32_0 = arith.constant 0 : i32
    return %arg0, %arg1, %c0_i32 : i32, i32, i32
  }
  func.func @transform_2(%arg0: i32, %arg1: i32) -> (i32, i32, i32) {
    %c0_i32 = arith.constant 0 : i32
    %c0_i32_0 = arith.constant 0 : i32
    %c0_i32_1 = arith.constant 0 : i32
    %c0_i32_2 = arith.constant 0 : i32
    return %c0_i32, %c0_i32_0, %c0_i32_1 : i32, i32, i32
  }
  func.func @transform_3(%arg0: i32, %arg1: i32) -> (i32, i32) {
    %c0_i32 = arith.constant 0 : i32
    %c0_i32_0 = arith.constant 0 : i32
    %c0_i32_1 = arith.constant 0 : i32
    return %c0_i32, %c0_i32_0 : i32, i32
  }
  func.func @transform_4(%arg0: i32, %arg1: i32) -> (i32, i32, i32) {
    %c0_i32 = arith.constant 0 : i32
    %c0_i32_0 = arith.constant 0 : i32
    %c0_i32_1 = arith.constant 0 : i32
    return %arg0, %c0_i32, %c0_i32_0 : i32, i32, i32
  }
}

</mosaic_0001>

<llo_original>
// kernel: tpu_custom_call.1
$region0: #{tpu_custom_call.1}
  #allocation0 [shape = 'u32[]', space=smem, size = 0x4, offset = 0x4, fixed_abs, tag = 'smem constant byte address 0x4 - core index']
  #allocation1 [shape = 'u32[72,128]{1,0:T(1,128)}', space=vmem, size = 0x9000, scoped, tag = 'internal scratch']
  #allocation2 [shape = 'f32[2,1]{1,0:T(2,128)}', space=vmem, size = 0x400, scoped, tag = 'scratch operand']
  #allocation3 [shape = 'f32[2,1]{1,0:T(2,128)}', space=vmem, size = 0x400, scoped, tag = 'scratch operand']
  #allocation4 [shape = 'f32[2,128]{1,0:T(2,128)}', space=vmem, size = 0x400, scoped, tag = 'scratch operand']
  %s0 = inlined_call_operand.vmem [shape: s32[4,2,1], index: 0, kind: input, shape index: {}]
  %s1 = inlined_call_operand.hbm [shape: f32[8,16,128], index: 1, kind: input, shape index: {}]
  %s2 = inlined_call_operand.vmem [shape: f32[2,2,128], index: 2, kind: input, shape index: {}]
  %s3 = inlined_call_operand.hbm [shape: f32[128,128], index: 3, kind: input, shape index: {}]
  %s4 = inlined_call_operand.hbm [shape: f32[8,1,128], index: 4, kind: output, shape index: {}]
  %s5 = sld [smem:[#allocation0]]
  $region65: #{tpu_custom_call.1} parent=0
    _
  %s7 = ssub.s32 1, %s5
  %s8 = scalar_select 0, %s7, %s5
  $region1: #{tpu_custom_call.1} parent=0
    #allocation5 [shape = 'u8[32768]{0}', space=vmem, size = 0x8000, scoped, tag = 'input window, operand 1']
    #allocation6 [shape = 's32[2]{0}', space=sflag, size = 0x8, scoped, tag = 'scoped memory for tpu_custom_call.1']
    #allocation7 [shape = 's32[2]{0}', space=sflag, size = 0x8, scoped, tag = 'scoped memory for tpu_custom_call.1']
    #allocation8 [shape = 'u8[65536]{0}', space=vmem, size = 0x10000, scoped, tag = 'input window, operand 3, single buffered']
    #allocation9 [shape = 's32[1]{0}', space=sflag, size = 0x4, scoped, tag = 'scoped memory for tpu_custom_call.1']
    #allocation10 [shape = 'u8[2048]{0}', space=vmem, size = 0x800, scoped, tag = 'output window, operand 0']
    %9 = vsyncpa [#allocation6], 0
    %s10 = scalar_lea.sflag [#allocation6], 1
    %11 = vsyncpa %s10, 0
    %12 = vsyncpa [#allocation9], 0
    %13 = vsyncpa [#allocation7], 0
    %s14 = scalar_lea.sflag [#allocation7], 1
    %15 = vsyncpa %s14, 0
    loop: start=0, step=1, limit=6
    $region2: #{tpu_custom_call.1} parent=1 // loop_pre_header
      _
    $region3: #{tpu_custom_call.1} parent=1 // loop_header
      %s17 = sphi 0, %s21
      %p18 = scmp.ge.s32.totalorder %s17, 6
      %s24 = sphi 0, %s36
      %s25 = sphi 0, %s32
      %s26 = sphi 0, %s24
      %s27 = sphi 0, %s25
      %s28 = sphi 0, %s26
      %s29 = sphi 0, %s27
      %s39 = sphi 0, %s41
      %s42 = sphi 0, %s39
      %s43 = sphi 0, %s42
      %s59 = sphi 0, %s43
      %s67 = sphi 0, %s69
      %s70 = sphi 0, %s67
      %s71 = sphi 0, %s70
      %s87 = sphi 0, %s71
      %s91 = sphi 0, %s91
      %s93 = sphi 0, %s91
      %s94 = sphi 0, %s93
      %s108 = sphi 0, %s94
      %s112 = sphi 0, %s112
      %s114 = sphi 0, %s112
      %s115 = sphi 0, %s114
      %s129 = sphi 0, %s115
      %s135 = sphi 0, %s137
      %s138 = sphi 0, %s135
      %s139 = sphi 0, %s138
      %s155 = sphi 0, %s139
    $region4: #{tpu_custom_call.1} parent=1 // loop_header_branch
      %20 = sbr.rel (%p18) target = $region8
    $region5: #{tpu_custom_call.1} parent=1 // loop_body
      %s22 = ssub.s32 %s17, 1
      %s23 = ssub.s32 %s17, 2
      %s30 = sadd.s32 1, %s25
      %p31 = scmp.ge.s32.totalorder %s30, 1
      %s32 = scalar_select %p31, 0, %s30
      %s33 = sadd.s32 1, %s24
      %s34 = scalar_select %p31, %s33, %s24
      %p35 = scmp.ge.s32.totalorder %s34, 4
      %s36 = scalar_select %p35, 0, %s34
      %s37 = ssub.s32 %s24, %s36
      %p38 = scmp.eq.s32.totalorder %s37, 0
      %s40 = sadd.s32 %s39, 1
      %s41 = scalar_select %p38, %s39, %s40
      %p44 = pneg %p38
      %p45 = scmp.eq.s32.totalorder %s17, 3
      %p46 = por %p44, %p45
      %p47 = scmp.ne.s32.totalorder %s39, %s42
      %p48 = scmp.eq.s32.totalorder %s17, 0
      %p49 = por %p47, %p48
      %p50 = scmp.ne.s32.totalorder %s39, %s42
      %p51 = scmp.eq.s32.totalorder %s22, 3
      %p52 = por %p50, %p51
      %p53 = scmp.ne.s32.totalorder %s42, %s43
      %p54 = scmp.eq.s32.totalorder %s22, 0
      %p55 = por %p53, %p54
      %p56 = scmp.ne.s32.totalorder %s42, %s43
      %p57 = scmp.eq.s32.totalorder %s23, 3
      %p58 = por %p56, %p57
      %p60 = scmp.ne.s32.totalorder %s43, %s59
      %p61 = scmp.eq.s32.totalorder %s23, 0
      %p62 = por %p60, %p61
      %s63 = ssub.s32 %s24, %s36
      %s64 = ssub.s32 %s25, %s32
      %s65 = sor.u32 %s63, %s64
      %p66 = scmp.eq.s32.totalorder %s65, 0
      %s68 = sadd.s32 %s67, 1
      %s69 = scalar_select %p66, %s67, %s68
      %p72 = pneg %p66
      %p73 = scmp.eq.s32.totalorder %s17, 3
      %p74 = por %p72, %p73
      %p75 = scmp.ne.s32.totalorder %s67, %s70
      %p76 = scmp.eq.s32.totalorder %s17, 0
      %p77 = por %p75, %p76
      %p78 = scmp.ne.s32.totalorder %s67, %s70
      %p79 = scmp.eq.s32.totalorder %s22, 3
      %p80 = por %p78, %p79
      %p81 = scmp.ne.s32.totalorder %s70, %s71
      %p82 = scmp.eq.s32.totalorder %s22, 0
      %p83 = por %p81, %p82
      %p84 = scmp.ne.s32.totalorder %s70, %s71
      %p85 = scmp.eq.s32.totalorder %s23, 3
      %p86 = por %p84, %p85
      %p88 = scmp.ne.s32.totalorder %s71, %s87
      %p89 = scmp.eq.s32.totalorder %s23, 0
      %p90 = por %p88, %p89
      %s92 = sadd.s32 %s91, 1
      %p95 = scmp.eq.s32.totalorder %s17, 3
      %p96 = scmp.ne.s32.totalorder %s91, %s93
      %p97 = scmp.eq.s32.totalorder %s17, 0
      %p98 = por %p96, %p97
      %p99 = scmp.ne.s32.totalorder %s91, %s93
      %p100 = scmp.eq.s32.totalorder %s22, 3
      %p101 = por %p99, %p100
      %p102 = scmp.ne.s32.totalorder %s93, %s94
      %p103 = scmp.eq.s32.totalorder %s22, 0
      %p104 = por %p102, %p103
      %p105 = scmp.ne.s32.totalorder %s93, %s94
      %p106 = scmp.eq.s32.totalorder %s23, 3
      %p107 = por %p105, %p106
      %p109 = scmp.ne.s32.totalorder %s94, %s108
      %p110 = scmp.eq.s32.totalorder %s23, 0
      %p111 = por %p109, %p110
      %s113 = sadd.s32 %s112, 1
      %p116 = scmp.eq.s32.totalorder %s17, 3
      %p117 = scmp.ne.s32.totalorder %s112, %s114
      %p118 = scmp.eq.s32.totalorder %s17, 0
      %p119 = por %p117, %p118
      %p120 = scmp.ne.s32.totalorder %s112, %s114
      %p121 = scmp.eq.s32.totalorder %s22, 3
      %p122 = por %p120, %p121
      %p123 = scmp.ne.s32.totalorder %s114, %s115
      %p124 = scmp.eq.s32.totalorder %s22, 0
      %p125 = por %p123, %p124
      %p126 = scmp.ne.s32.totalorder %s114, %s115
      %p127 = scmp.eq.s32.totalorder %s23, 3
      %p128 = por %p126, %p127
      %p130 = scmp.ne.s32.totalorder %s115, %s129
      %p131 = scmp.eq.s32.totalorder %s23, 0
      %p132 = por %p130, %p131
      %s133 = ssub.s32 %s24, %s36
      %p134 = scmp.eq.s32.totalorder %s133, 0
      %s136 = sadd.s32 %s135, 1
      %s137 = scalar_select %p134, %s135, %s136
      %p140 = pneg %p134
      %p141 = scmp.eq.s32.totalorder %s17, 3
      %p142 = por %p140, %p141
      %p143 = scmp.ne.s32.totalorder %s135, %s138
      %p144 = scmp.eq.s32.totalorder %s17, 0
      %p145 = por %p143, %p144
      %p146 = scmp.ne.s32.totalorder %s135, %s138
      %p147 = scmp.eq.s32.totalorder %s22, 3
      %p148 = por %p146, %p147
      %p149 = scmp.ne.s32.totalorder %s138, %s139
      %p150 = scmp.eq.s32.totalorder %s22, 0
      %p151 = por %p149, %p150
      %p152 = scmp.ne.s32.totalorder %s138, %s139
      %p153 = scmp.eq.s32.totalorder %s23, 3
      %p154 = por %p152, %p153
      %p156 = scmp.ne.s32.totalorder %s139, %s155
      %p157 = scmp.eq.s32.totalorder %s23, 0
      %p158 = por %p156, %p157
      %p159 = scmp.le.s32.totalorder 1, %s17
      %p160 = scmp.lt.s32.totalorder %s17, 5
      %p161 = pnand %p159, %p160
      %p162 = pneg %p161
      // Predicated region
      $region9: #{tpu_custom_call.1} parent=5 // pred_check
        _
      $region10: #{tpu_custom_call.1} parent=5 // pred_check_branch
        %164 = sbr.rel (%p161) target = $region12
      $region11: #{tpu_custom_call.1} parent=5 // pred_region
        %s165 = ssub.s32 %s17, 1
        // Predicated region
        $region13: #{tpu_custom_call.1} parent=11 // pred_check
          %p166 = pneg %p104
        $region14: #{tpu_custom_call.1} parent=11 // pred_check_branch
          %168 = sbr.rel (%p166) target = $region16
        $region15: #{tpu_custom_call.1} parent=11 // pred_region
          _
        $region16: #{tpu_custom_call.1} parent=11 // pred_fallthru
          _
        // Predicated region
        $region17: #{tpu_custom_call.1} parent=11 // pred_check
          %p169 = pneg %p125
        $region18: #{tpu_custom_call.1} parent=11 // pred_check_branch
          %171 = sbr.rel (%p169) target = $region20
        $region19: #{tpu_custom_call.1} parent=11 // pred_region
          %173 = vsyncadd [#allocation9], 0
          %s174 = sshll.u32 %s3, 4
          %s175 = int_to_ptr.hbm [resolvable:$true] %s174
          %s176 = sshll.u32 [#allocation8], 4
          %s177 = int_to_ptr.vmem [resolvable:$true] %s176
          %182 = dma.hbm_to_vmem [thread:$0]  %s175, 2048, %s177, [#allocation9], 128, 128, 8
        $region20: #{tpu_custom_call.1} parent=11 // pred_fallthru
          _
      $region12: #{tpu_custom_call.1} parent=5 // pred_fallthru
        _
      %p183 = scmp.lt.s32.totalorder %s17, 4
      // Predicated region
      $region21: #{tpu_custom_call.1} parent=5 // pred_check
        %p184 = pneg %p183
      $region22: #{tpu_custom_call.1} parent=5 // pred_check_branch
        %186 = sbr.rel (%p184) target = $region24
      $region23: #{tpu_custom_call.1} parent=5 // pred_region
        // Predicated region
        $region25: #{tpu_custom_call.1} parent=23 // pred_check
          %p187 = pneg %p49
        $region26: #{tpu_custom_call.1} parent=23 // pred_check_branch
          %189 = sbr.rel (%p187) target = $region28
        $region27: #{tpu_custom_call.1} parent=23 // pred_region
          %p190 = scmp.lt.s32.totalorder %s24, 3
          %s191 = scalar_select %p190, %s24, 3
          %s192 = smul.addr %s191, 2
          %s193 = scalar_lea.vmem %s0, %s192
        $region28: #{tpu_custom_call.1} parent=23 // pred_fallthru
          _
        // Predicated region
        $region29: #{tpu_custom_call.1} parent=23 // pred_check
          %p194 = pneg %p77
        $region30: #{tpu_custom_call.1} parent=23 // pred_check_branch
          %196 = sbr.rel (%p194) target = $region32
        $region31: #{tpu_custom_call.1} parent=23 // pred_region
          %s197 = sand.u32 %s67, 1
          %s198 = scalar_lea.sflag [#allocation6], %s197
          %s199 = sand.u32 %s67, 1
          %s200 = smul.addr %s199, 32
          %s201 = scalar_lea.vmem [#allocation5], %s200
          %s202 = smul.u32 2, %s24
          %s203 = smul.u32 2, %s25
          %205 = vsyncadd %s198, 0
          %s206 = smul.addr %s202, 2
          %s207 = sadd.s32 %s203, %s206
          %s208 = smul.addr %s207, 8
          %s209 = scalar_lea.hbm %s1, %s208
          %s210 = sshll.u32 %s209, 4
          %s211 = int_to_ptr.hbm [resolvable:$true] %s210
          %s212 = sshll.u32 %s201, 4
          %s213 = int_to_ptr.vmem [resolvable:$true] %s212
          %218 = dma.hbm_to_vmem [thread:$0]  %s211, 512, %s213, %s198, 128, 128, 8
        $region32: #{tpu_custom_call.1} parent=23 // pred_fallthru
          _
      $region24: #{tpu_custom_call.1} parent=5 // pred_fallthru
        _
      %p219 = scmp.le.s32.totalorder 1, %s17
      %p220 = scmp.lt.s32.totalorder %s17, 5
      %p221 = pnand %p219, %p220
      %p222 = pneg %p221
      // Predicated region
      $region33: #{tpu_custom_call.1} parent=5 // pred_check
        _
      $region34: #{tpu_custom_call.1} parent=5 // pred_check_branch
        %224 = sbr.rel (%p221) target = $region36
      $region35: #{tpu_custom_call.1} parent=5 // pred_region
        %s225 = ssub.s32 %s17, 1
        %s226 = sand.u32 %s70, 1
        %s227 = scalar_lea.sflag [#allocation6], %s226
        %s228 = sand.u32 %s70, 1
        %s229 = smul.addr %s228, 32
        %s230 = scalar_lea.vmem [#allocation5], %s229
        // Predicated region
        $region37: #{tpu_custom_call.1} parent=35 // pred_check
          %p231 = pneg %p83
        $region38: #{tpu_custom_call.1} parent=35 // pred_check_branch
          %233 = sbr.rel (%p231) target = $region40
        $region39: #{tpu_custom_call.1} parent=35 // pred_region
          %235 = dma.done %s227, 512
        $region40: #{tpu_custom_call.1} parent=35 // pred_fallthru
          _
        // Predicated region
        $region41: #{tpu_custom_call.1} parent=35 // pred_check
          %p236 = pneg %p125
        $region42: #{tpu_custom_call.1} parent=35 // pred_check_branch
          %238 = sbr.rel (%p236) target = $region44
        $region43: #{tpu_custom_call.1} parent=35 // pred_region
          %240 = dma.done [#allocation9], 2048
        $region44: #{tpu_custom_call.1} parent=35 // pred_fallthru
          _
        %p241 = scmp.lt.s32.totalorder %s26, 3
        %s242 = scalar_select %p241, %s26, 3
        %s243 = smul.addr %s242, 2
        %s244 = scalar_lea.vmem %s0, %s243
        %p245 = pneg %p55
        %p246 = pneg %p52
        %s247 = sand.u32 %s70, 1
        %s248 = scalar_lea.sflag [#allocation6], %s247
        %s249 = sand.u32 %s70, 1
        %s250 = smul.addr %s249, 32
        %s251 = scalar_lea.vmem [#allocation5], %s250
        %p252 = pneg %p83
        %p253 = pneg %p80
        %p254 = pneg %p104
        %p255 = pneg %p101
        %p256 = pneg %p125
        %p257 = pneg %p122
        %p258 = pneg %p151
        %p259 = pneg %p148
        %s260 = sand.u32 %s138, 1
        %s261 = scalar_lea.sflag [#allocation7], %s260
        %s262 = sand.u32 %s138, 1
        %s263 = smul.addr %s262, 2
        %s264 = scalar_lea.vmem [#allocation10], %s263
        %p265 = scmp.lt.s32.totalorder %s26, 3
        %s266 = scalar_select %p265, %s26, 3
        %s267 = smul.addr %s266, 2
        %s268 = scalar_lea.vmem %s0, %s267
        %s269 = smul.u32 2, %s26
        %s270 = smul.u32 2, %s27
        %s271 = smul.u32 2, %s26
        %p272 = scmp.eq.s32.totalorder %s27, 0
        // Predicated region
        $region45: #{tpu_custom_call.1} parent=35 // pred_check
          %p273 = pneg %p272
        $region46: #{tpu_custom_call.1} parent=35 // pred_check_branch
          %275 = sbr.rel (%p273) target = $region48
        $region47: #{tpu_custom_call.1} parent=35 // pred_region
          %vm276 = vcmask 1024
          %277 = vst.msk [vmem:[#allocation2] sm:$0x3] %vm276, -inf
          %278 = vst.msk [vmem:[#allocation3] sm:$0x3] %vm276, 0.0
          %279 = vst [vmem:[#allocation4] sm:$0x3] 0.0
        $region48: #{tpu_custom_call.1} parent=35 // pred_fallthru
          _
        %v280 = vld [vmem:[%s230] sm:$0xff]
        %v281 = vld [vmem:[%s230 + $0x8] sm:$0xff]
        %v282 = vld [vmem:[%s230 + $0x10] sm:$0xff]
        %v283 = vld [vmem:[%s230 + $0x18] sm:$0xff]
        %v284 = vld [vmem:[%s2] sm:$0x3]
        %v285 = vld [vmem:[%s2 + $0x2] sm:$0x3]
        %286 = vmatpush.xpose.msra.mxu0 0.0
        %287 = vmatpush.xpose.msra.mxu0 0.0
        %288 = vmatpush.xpose.msra.mxu0 0.0
        %289 = vmatpush.xpose.msra.mxu0 0.0
        %290 = vmatpush.xpose.msra.mxu0 0.0
        %291 = vmatpush.xpose.msra.mxu0 0.0
        %292 = vmatpush.xpose.msra.mxu0 0.0
        %293 = vmatpush.xpose.msra.mxu0 0.0
        %294 = vmatpush.xpose.msra.mxu0 0.0
        %295 = vmatpush.xpose.msra.mxu0 0.0
        %296 = vmatpush.xpose.msra.mxu0 0.0
        %297 = vmatpush.xpose.msra.mxu0 0.0
        %298 = vmatpush.xpose.msra.mxu0 0.0
        %299 = vmatpush.xpose.msra.mxu0 0.0
        %300 = vmatpush.xpose.msra.mxu0 %v281
        %301 = vmatpush.xpose.msra.mxu0 %v280
        %302 = vmatmul.f32.gmra.mxu0 %v284
        %v303 = vpop.f32.mrf.mxu0
        %v304 = vadd.f32 0.0, %v303
        %305 = vdwg.mxu0
        %306 = vmatpush.xpose.msra.mxu0 0.0
        %307 = vmatpush.xpose.msra.mxu0 0.0
        %308 = vmatpush.xpose.msra.mxu0 0.0
        %309 = vmatpush.xpose.msra.mxu0 0.0
        %310 = vmatpush.xpose.msra.mxu0 0.0
        %311 = vmatpush.xpose.msra.mxu0 0.0
        %312 = vmatpush.xpose.msra.mxu0 0.0
        %313 = vmatpush.xpose.msra.mxu0 0.0
        %314 = vmatpush.xpose.msra.mxu0 0.0
        %315 = vmatpush.xpose.msra.mxu0 0.0
        %316 = vmatpush.xpose.msra.mxu0 0.0
        %317 = vmatpush.xpose.msra.mxu0 0.0
        %318 = vmatpush.xpose.msra.mxu0 0.0
        %319 = vmatpush.xpose.msra.mxu0 0.0
        %320 = vmatpush.xpose.msra.mxu0 %v283
        %321 = vmatpush.xpose.msra.mxu0 %v282
        %322 = vmatmul.f32.gmra.mxu0 %v285
        %v323 = vpop.f32.mrf.mxu0
        %v324 = vadd.f32 0.0, %v323
        %325 = vdwg.mxu0
        %v326 = vtanh.pop %v304
        %v327 = vtanh.pop %v324
        %v328 = vxor.u32 %v304, 2147483648
        %v329 = vxor.u32 %v324, 2147483648
        %v330 = vmul.f32 %v328, 1.442695
        %v331 = vpow.pop %v330
        %v332 = vmul.f32 %v329, 1.442695
        %v333 = vpow.pop %v332
        %v334 = vadd.f32 %v331, 1.0
        %v335 = vadd.f32 %v333, 1.0
        %v336 = vrcp.pop %v334
        %v337 = vmul.f32 %v334, %v336
        %v338 = vsub.f32 1.0, %v337
        %v339 = vmul.f32 %v336, %v338
        %v340 = vadd.f32 %v336, %v339
        %vm341 = vweird.f32 %v334
        %vm342 = vweird.f32 %v336
        %vm343 = vmor %vm341, %vm342
        %v344 = vsel %vm343, %v336, %v340
        %v345 = vand.u32 2147483647, %v334
        %vm346 = vcmp.eq.f32.partialorder %v345, 8.507059e+37
        %v347 = vand.u32 %v334, 2147483648
        %v348 = vor.u32 1.1754944e-38, %v347
        %v349 = vsel %vm346, %v348, %v344
        %v350 = vmul.f32 1.0, %v349
        %v351 = vrcp.pop %v335
        %v352 = vmul.f32 %v335, %v351
        %v353 = vsub.f32 1.0, %v352
        %v354 = vmul.f32 %v351, %v353
        %v355 = vadd.f32 %v351, %v354
        %vm356 = vweird.f32 %v335
        %vm357 = vweird.f32 %v351
        %vm358 = vmor %vm356, %vm357
        %v359 = vsel %vm358, %v351, %v355
        %v360 = vand.u32 2147483647, %v335
        %vm361 = vcmp.eq.f32.partialorder %v360, 8.507059e+37
        %v362 = vand.u32 %v335, 2147483648
        %v363 = vor.u32 1.1754944e-38, %v362
        %v364 = vsel %vm361, %v363, %v359
        %v365 = vmul.f32 1.0, %v364
        %v368 = vrot.slane %v350, 1
        %v369 = vrot.slane %v365, 1
        %v372 = vmul.f32 %v326, %v368
        %v373 = vmul.f32 %v327, %v369
        %v374 = vld [vmem:[%s268] sm:$0x3]
        %v375 = vlaneseq
        %v376 = vand.u32 %v375, 127
        %s377 = smul.u32 %s27, 16
        %v378 = vstv %s377
        %v379 = vadd.s32 %v376, %v378
        %380 = vset.pattern.permute.xlu0 0
        %381 = vperm.xlu0 %380, %v374
        %v382 = vpop.permute.xlu0 %381
        %vm383 = vcmp.lt.s32.totalorder %v379, %v382
        %v386 = vrot.slane %v373, 7
        %vm387 = vcmask 1041409
        %v388 = vsel %vm387, %v386, %v372
        %v390 = vsel %vm383, %v388, -10000.0
        %v391 = vld [vmem:[#allocation2] sm:$0x3]
        %vm392 = vcmask 123904
        %v393 = vsel %vm392, %v390, -inf
        %394 = vmax.xlane.f32.xlu0 %v393
        %v395 = vpop.xlane.xlu0 %394
        %v396 = vmax.f32 %v391, %v395
        %v397 = vsub.f32 %v391, %v396
        %v398 = vmul.f32 %v397, 1.442695
        %v399 = vpow.pop %v398
        %401 = vset.pattern.permute.xlu0 0
        %402 = vperm.xlu0 %401, %v396
        %v403 = vpop.permute.xlu0 %402
        %v405 = vsub.f32 %v390, %v403
        %v406 = vmul.f32 %v405, 1.442695
        %v407 = vpow.pop %v406
        %v408 = vld [vmem:[#allocation3] sm:$0x3]
        %v409 = vmul.f32 %v399, %v408
        %v410 = vsel %vm392, %v407, 0.0
        %411 = vadd.xlane.f32.xlu0 %v410
        %v412 = vpop.xlane.xlu0 %411
        %v413 = vadd.f32 %v409, %v412
        %vm414 = vcmask 1024
        %415 = vst.msk [vmem:[#allocation3] sm:$0x3] %vm414, %v413
        %v417 = vrot.slane %v407, 1
        %vm418 = vcmask 130048
        %v419 = vsel %vm418, %v407, 0
        %421 = vmatpush.msra.mxu0 0.0
        %422 = vmatpush.msra.mxu0 0.0
        %423 = vmatpush.msra.mxu0 0.0
        %424 = vmatpush.msra.mxu0 0.0
        %425 = vmatpush.msra.mxu0 0.0
        %426 = vmatpush.msra.mxu0 0.0
        %427 = vmatpush.msra.mxu0 0.0
        %428 = vmatpush.msra.mxu0 0.0
        %429 = vmatpush.msra.mxu0 0.0
        %430 = vmatpush.msra.mxu0 0.0
        %431 = vmatpush.msra.mxu0 0.0
        %432 = vmatpush.msra.mxu0 0.0
        %433 = vmatpush.msra.mxu0 0.0
        %434 = vmatpush.msra.mxu0 0.0
        %435 = vmatpush.msra.mxu0 %v281
        %436 = vmatpush.msra.mxu0 %v280
        %437 = vmatmul.f32.gmra.mxu0 %v419
        %v438 = vpop.f32.mrf.mxu0
        %v439 = vadd.f32 0.0, %v438
        %440 = vdwg.mxu0
        %v441 = vsel %vm418, %v417, 0
        %443 = vmatpush.msra.mxu0 0.0
        %444 = vmatpush.msra.mxu0 0.0
        %445 = vmatpush.msra.mxu0 0.0
        %446 = vmatpush.msra.mxu0 0.0
        %447 = vmatpush.msra.mxu0 0.0
        %448 = vmatpush.msra.mxu0 0.0
        %449 = vmatpush.msra.mxu0 0.0
        %450 = vmatpush.msra.mxu0 0.0
        %451 = vmatpush.msra.mxu0 0.0
        %452 = vmatpush.msra.mxu0 0.0
        %453 = vmatpush.msra.mxu0 0.0
        %454 = vmatpush.msra.mxu0 0.0
        %455 = vmatpush.msra.mxu0 0.0
        %456 = vmatpush.msra.mxu0 0.0
        %457 = vmatpush.msra.mxu0 %v283
        %458 = vmatpush.msra.mxu0 %v282
        %459 = vmatmul.f32.gmra.mxu0 %v441
        %v460 = vpop.f32.mrf.mxu0
        %v461 = vadd.f32 0.0, %v460
        %462 = vdwg.mxu0
        %v463 = vld [vmem:[#allocation4] sm:$0x3]
        %465 = vset.pattern.permute.xlu0 0
        %466 = vperm.xlu0 %465, %v399
        %v467 = vpop.permute.xlu0 %466
        %v469 = vmul.f32 %v467, %v463
        %v472 = vrot.slane %v461, 7
        %v473 = vsel %vm387, %v472, %v439
        %v475 = vadd.f32 %v469, %v473
        %476 = vst [vmem:[#allocation4] sm:$0x3] %v475
        %477 = vst.msk [vmem:[#allocation2] sm:$0x3] %vm414, %v396
        // Predicated region
        $region49: #{tpu_custom_call.1} parent=35 // pred_check
          %p478 = pneg %p272
        $region50: #{tpu_custom_call.1} parent=35 // pred_check_branch
          %480 = sbr.rel (%p478) target = $region52
        $region51: #{tpu_custom_call.1} parent=35 // pred_region
          %v481 = vld [vmem:[#allocation3] sm:$0x3]
          %v482 = vrcp.pop %v481
          %v483 = vld [vmem:[#allocation4] sm:$0x3]
          %485 = vset.pattern.permute.xlu0 0
          %486 = vperm.xlu0 %485, %v482
          %v487 = vpop.permute.xlu0 %486
          %v489 = vmul.f32 %v483, %v487
          %v490 = vld [vmem:[#allocation8] sm:$0xff]
          %v491 = vld [vmem:[#allocation8 + $0x8] sm:$0xff]
          %v492 = vld [vmem:[#allocation8 + $0x10] sm:$0xff]
          %v493 = vld [vmem:[#allocation8 + $0x18] sm:$0xff]
          %v494 = vld [vmem:[#allocation8 + $0x20] sm:$0xff]
          %v495 = vld [vmem:[#allocation8 + $0x28] sm:$0xff]
          %v496 = vld [vmem:[#allocation8 + $0x30] sm:$0xff]
          %v497 = vld [vmem:[#allocation8 + $0x38] sm:$0xff]
          %v498 = vld [vmem:[#allocation8 + $0x40] sm:$0xff]
          %v499 = vld [vmem:[#allocation8 + $0x48] sm:$0xff]
          %v500 = vld [vmem:[#allocation8 + $0x50] sm:$0xff]
          %v501 = vld [vmem:[#allocation8 + $0x58] sm:$0xff]
          %v502 = vld [vmem:[#allocation8 + $0x60] sm:$0xff]
          %v503 = vld [vmem:[#allocation8 + $0x68] sm:$0xff]
          %v504 = vld [vmem:[#allocation8 + $0x70] sm:$0xff]
          %v505 = vld [vmem:[#allocation8 + $0x78] sm:$0xff]
          %506 = vmatpush.msra.mxu0 %v505
          %507 = vmatpush.msra.mxu0 %v504
          %508 = vmatpush.msra.mxu0 %v503
          %509 = vmatpush.msra.mxu0 %v502
          %510 = vmatpush.msra.mxu0 %v501
          %511 = vmatpush.msra.mxu0 %v500
          %512 = vmatpush.msra.mxu0 %v499
          %513 = vmatpush.msra.mxu0 %v498
          %514 = vmatpush.msra.mxu0 %v497
          %515 = vmatpush.msra.mxu0 %v496
          %516 = vmatpush.msra.mxu0 %v495
          %517 = vmatpush.msra.mxu0 %v494
          %518 = vmatpush.msra.mxu0 %v493
          %519 = vmatpush.msra.mxu0 %v492
          %520 = vmatpush.msra.mxu0 %v491
          %521 = vmatpush.msra.mxu0 %v490
          %522 = vmatmul.f32.gmra.mxu0 %v489
          %v523 = vpop.f32.mrf.mxu0
          %v524 = vadd.f32 0.0, %v523
          %525 = vdwg.mxu0
          %v527 = vrot.slane %v524, 1
          %529 = vst [vmem:[%s264] sm:$0x1] %v524
          %530 = vst [vmem:[%s264 + $0x1] sm:$0x1] %v527
        $region52: #{tpu_custom_call.1} parent=35 // pred_fallthru
          _
        %s531 = sand.u32 %s138, 1
        %s532 = scalar_lea.sflag [#allocation7], %s531
        %s533 = sand.u32 %s138, 1
        %s534 = smul.addr %s533, 2
        %s535 = scalar_lea.vmem [#allocation10], %s534
        // Predicated region
        $region53: #{tpu_custom_call.1} parent=35 // pred_check
          %p536 = pneg %p148
        $region54: #{tpu_custom_call.1} parent=35 // pred_check_branch
          %538 = sbr.rel (%p536) target = $region56
        $region55: #{tpu_custom_call.1} parent=35 // pred_region
          %s539 = smul.u32 2, %s26
          %541 = vsyncadd %s532, 0
          %s542 = scalar_lea.hbm %s4, %s539
          %s543 = sshll.u32 %s535, 4
          %s544 = int_to_ptr.vmem [resolvable:$true] %s543
          %s545 = sshll.u32 %s542, 4
          %s546 = int_to_ptr.hbm [resolvable:$true] %s545
          %551 = dma.vmem_to_hbm [thread:$0]  %s544, 32, %s546, %s532, 16, 16, 1
        $region56: #{tpu_custom_call.1} parent=35 // pred_fallthru
          _
      $region36: #{tpu_custom_call.1} parent=5 // pred_fallthru
        _
      %p552 = scmp.le.s32.totalorder 2, %s17
      // Predicated region
      $region57: #{tpu_custom_call.1} parent=5 // pred_check
        %p553 = pneg %p552
      $region58: #{tpu_custom_call.1} parent=5 // pred_check_branch
        %555 = sbr.rel (%p553) target = $region60
      $region59: #{tpu_custom_call.1} parent=5 // pred_region
        %s556 = ssub.s32 %s17, 2
        // Predicated region
        $region61: #{tpu_custom_call.1} parent=59 // pred_check
          %p557 = pneg %p154
        $region62: #{tpu_custom_call.1} parent=59 // pred_check_branch
          %559 = sbr.rel (%p557) target = $region64
        $region63: #{tpu_custom_call.1} parent=59 // pred_region
          %s560 = sand.u32 %s139, 1
          %s561 = scalar_lea.sflag [#allocation7], %s560
          %s562 = sand.u32 %s139, 1
          %s563 = smul.addr %s562, 2
          %s564 = scalar_lea.vmem [#allocation10], %s563
          %566 = dma.done %s561, 32
        $region64: #{tpu_custom_call.1} parent=59 // pred_fallthru
          _
      $region60: #{tpu_custom_call.1} parent=5 // pred_fallthru
        _
    $region6: #{tpu_custom_call.1} parent=1 // loop_footer
      %s21 = sadd.s32 1, %s17
    $region7: #{tpu_custom_call.1} parent=1 // loop_footer_branch
      %16 = sbr.rel target = $region3
    $region8: #{tpu_custom_call.1} parent=1 // loop_exit
      _
    %567 = vsyncpa [#allocation6], 1
    %s568 = scalar_lea.sflag [#allocation6], 1
    %569 = vsyncpa %s568, 1
    %570 = vsyncpa [#allocation9], 1
    %571 = vsyncpa [#allocation7], 1
    %s572 = scalar_lea.sflag [#allocation7], 1
    %573 = vsyncpa %s572, 1

</llo_original>
